<compile_context>
chip_gen: v6e
topology: v6e:2x2x1
jax: 0.10.0
libtpu: 0.0.40
codegen_flags: <defaults>
</compile_context>

<pallas_src>
import jax
import jax.numpy as jnp
from jax.experimental import pallas as pl
from jax.experimental.pallas import tpu as pltpu

LANE = 128


def dense_head_kernel(cls_ref, wd_ref, bd_ref, wc_ref, bc_ref,
                      probs_ref, yhat_ref):
    # cls_ref: (TB, H)   wd_ref: (H, H)   bd_ref: (1, H)
    # wc_ref: (H, Lpad)  bc_ref: (1, Lpad)
    # probs_ref: (TB, Lpad)  yhat_ref: (TB, 1)

    # dropout -> identity (eval mode); dense (H -> H) + tanh
    x = jnp.dot(cls_ref[...], wd_ref[...], preferred_element_type=jnp.float32)
    x = jnp.tanh(x + bd_ref[...])

    # dropout -> identity (eval mode); classifier head (H -> Lpad).
    # Pad columns of wc are zero and pad columns of bc are -1e30, so padded
    # logits are hugely negative: zero softmax mass, never the argmax.
    z = jnp.dot(x, wc_ref[...], preferred_element_type=jnp.float32) + bc_ref[...]

    # argmax from pre-softmax logits (softmax is monotonic => identical index,
    # first occurrence on ties). Does not wait on the exp/reciprocal chain.
    num_cols = z.shape[-1]
    ids = jax.lax.broadcasted_iota(jnp.int32, z.shape, 1)
    maxv = jnp.max(z, axis=-1, keepdims=True)
    cand = jnp.where(z == maxv, ids, jnp.int32(num_cols))
    yhat_ref[...] = jnp.min(cand, axis=-1, keepdims=True)

    # numerically-stable softmax over the lane-padded label axis
    e = jnp.exp(z - maxv)                       # pad cols -> exp(-huge) == 0
    inv = pl.reciprocal(jnp.sum(e, axis=-1, keepdims=True), approx=True)
    probs_ref[...] = (e * inv).astype(probs_ref.dtype)


def _round_up(x, m):
    return ((x + m - 1) // m) * m


def tc_forward(last_hidden_state, labels, wd, bd, wc, bc):
    """Mirrors TC.forward for head='Dense': returns (logits, labels, y_hat).

    `logits` follows the module's naming: softmax probabilities, shape (B, L).
    """
    B, S, H = last_hidden_state.shape
    L = wc.shape[-1]

    # ---- [CLS] slice outside the kernel: only row 0 of the seq axis is used ----
    cls = last_hidden_state[:, 0, :]                       # (B, H)

    # ---- batch tiling: multiple of 8 sublanes, up to 128 for MXU fill ----
    TB = min(128, _round_up(B, 8))
    B_pad = _round_up(B, TB)
    if B_pad != B:
        cls = jnp.pad(cls, ((0, B_pad - B), (0, 0)))

    # ---- lane-pad the label axis to 128 (unmasked stores, dense MXU lanes) ----
    Lpad = _round_up(max(L, LANE), LANE)
    wc_p = jnp.zeros((H, Lpad), wc.dtype).at[:, :L].set(wc)
    bc_p = jnp.full((1, Lpad), jnp.float32(-1e30), bc.dtype).at[:, :L].set(bc)

    grid = (B_pad // TB,)

    probs_p, yhat_p = pl.pallas_call(
        dense_head_kernel,
        out_shape=(
            jax.ShapeDtypeStruct((B_pad, Lpad), jnp.float32),
            jax.ShapeDtypeStruct((B_pad, 1), jnp.int32),
        ),
        grid=grid,
        in_specs=[
            pl.BlockSpec((TB, H), lambda i: (i, 0)),       # CLS tile (pipelined)
            pl.BlockSpec((H, H), lambda i: (0, 0)),        # dense weight (resident)
            pl.BlockSpec((1, H), lambda i: (0, 0)),        # dense bias
            pl.BlockSpec((H, Lpad), lambda i: (0, 0)),     # classifier weight
            pl.BlockSpec((1, Lpad), lambda i: (0, 0)),     # classifier bias
        ],
        out_specs=(
            pl.BlockSpec((TB, Lpad), lambda i: (i, 0)),
            pl.BlockSpec((TB, 1), lambda i: (i, 0)),
        ),
        compiler_params=pltpu.CompilerParams(
            dimension_semantics=("parallel",),             # v7x: shard batch over 2 TCs
            vmem_limit_bytes=32 * 1024 * 1024,             # explicit; safe on 64 MiB v7x
        ),
    )(cls, wd, bd, wc_p, bc_p)

    logits = probs_p[:B, :L]
    y_hat = yhat_p[:B, 0]
    return logits, labels, y_hat


def reference_forward(last_hidden_state, wd, bd, wc, bc):
    cls = last_hidden_state[:, 0, :]
    x = jnp.tanh(cls @ wd + bd[0])
    z = x @ wc + bc[0]
    probs = jax.nn.softmax(z, axis=-1)
    return probs, jnp.argmax(probs, axis=-1)


if __name__ == "__main__":
    # small synthetic config: batch=2, seq=8, hidden=32, label_num=3
    B, S, H, L = 2, 8, 32, 3

    key = jax.random.PRNGKey(0)
    k_hid, k_wd, k_bd, k_wc, k_bc, k_lab = jax.random.split(key, 6)

    # synthetic encoder output (stands in for RobertaModel.last_hidden_state)
    last_hidden_state = jax.random.normal(k_hid, (B, S, H), dtype=jnp.float32)
    labels = jax.random.randint(k_lab, (B,), 0, L, dtype=jnp.int32)

    # deterministic nn.Linear-style init (uniform(-1/sqrt(fan_in), 1/sqrt(fan_in)))
    bound_d = 1.0 / (H ** 0.5)
    wd = jax.random.uniform(k_wd, (H, H), jnp.float32, -bound_d, bound_d)
    bd = jax.random.uniform(k_bd, (1, H), jnp.float32, -bound_d, bound_d)
    wc = jax.random.uniform(k_wc, (H, L), jnp.float32, -bound_d, bound_d)
    bc = jax.random.uniform(k_bc, (1, L), jnp.float32, -bound_d, bound_d)

    logits, labels_out, y_hat = jax.jit(tc_forward)(
        last_hidden_state, labels, wd, bd, wc, bc)
    jax.block_until_ready((logits, labels_out, y_hat))

    # sanity check against a plain-JAX reference of the Dense_head
    ref_logits, ref_yhat = reference_forward(last_hidden_state, wd, bd, wc, bc)
    assert logits.shape == (B, L) and y_hat.shape == (B,)
    assert jnp.allclose(logits, ref_logits, atol=2e-3, rtol=2e-3)
    assert jnp.all(y_hat == ref_yhat)
    assert jnp.all(labels_out == labels)

    print("KERNEL_OK")
</pallas_src>

<mosaic_0001>
module attributes {stable_mosaic.version = 11 : i64} {
  func.func @dense_head_kernel(%arg0: i32, %arg1: memref<8x32xf32, #tpu.memory_space<vmem>>, %arg2: memref<32x32xf32, #tpu.memory_space<vmem>>, %arg3: memref<1x32xf32, #tpu.memory_space<vmem>>, %arg4: memref<32x128xf32, #tpu.memory_space<vmem>>, %arg5: memref<1x128xf32, #tpu.memory_space<vmem>>, %arg6: memref<8x128xf32, #tpu.memory_space<vmem>>, %arg7: memref<8x1xi32, #tpu.memory_space<vmem>>) attributes {dimension_semantics = [#tpu.dimension_semantics<parallel>], iteration_bounds = array<i64: 1>, scalar_prefetch = 0 : i64, scratch_operands = 0 : i64, tpu.core_type = #tpu.core_type<tc>, window_params = [{transform_indices = @transform_0, window_bounds = array<i64: 8, 32>}, {pipeline_mode = #tpu.pipeline_mode<synchronous>, transform_indices = @transform_1, window_bounds = array<i64: 32, 32>}, {pipeline_mode = #tpu.pipeline_mode<synchronous>, transform_indices = @transform_2, window_bounds = array<i64: 1, 32>}, {pipeline_mode = #tpu.pipeline_mode<synchronous>, transform_indices = @transform_3, window_bounds = array<i64: 32, 128>}, {pipeline_mode = #tpu.pipeline_mode<synchronous>, transform_indices = @transform_4, window_bounds = array<i64: 1, 128>}, {transform_indices = @transform_5, window_bounds = array<i64: 8, 128>}, {transform_indices = @transform_6, window_bounds = array<i64: 8, 1>}]} {
    %c0 = arith.constant 0 : index
    %c0_0 = arith.constant 0 : index
    %0 = vector.load %arg1[%c0, %c0_0] : memref<8x32xf32, #tpu.memory_space<vmem>>, vector<8x32xf32>
    %c0_1 = arith.constant 0 : index
    %c0_2 = arith.constant 0 : index
    %1 = vector.load %arg2[%c0_1, %c0_2] : memref<32x32xf32, #tpu.memory_space<vmem>>, vector<32x32xf32>
    %cst = arith.constant dense<0.000000e+00> : vector<8x32xf32>
    %2 = tpu.matmul %0, %1, %cst {dimension_numbers = #tpu.dot_dimension_numbers<[1], [0], [0], [1], [0, 0, 1, 1], [], []>} : vector<8x32xf32>, vector<32x32xf32>, vector<8x32xf32> -> vector<8x32xf32>
    %c0_3 = arith.constant 0 : index
    %c0_4 = arith.constant 0 : index
    %3 = vector.load %arg3[%c0_3, %c0_4] : memref<1x32xf32, #tpu.memory_space<vmem>>, vector<1x32xf32>
    %4 = vector.broadcast %3 : vector<1x32xf32> to vector<8x32xf32>
    %5 = arith.addf %2, %4 : vector<8x32xf32>
    %6 = math.tanh %5 : vector<8x32xf32>
    %c0_5 = arith.constant 0 : index
    %c0_6 = arith.constant 0 : index
    %7 = vector.load %arg4[%c0_5, %c0_6] : memref<32x128xf32, #tpu.memory_space<vmem>>, vector<32x128xf32>
    %cst_7 = arith.constant dense<0.000000e+00> : vector<8x128xf32>
    %8 = tpu.matmul %6, %7, %cst_7 {dimension_numbers = #tpu.dot_dimension_numbers<[1], [0], [0], [1], [0, 0, 1, 1], [], []>} : vector<8x32xf32>, vector<32x128xf32>, vector<8x128xf32> -> vector<8x128xf32>
    %c0_8 = arith.constant 0 : index
    %c0_9 = arith.constant 0 : index
    %9 = vector.load %arg5[%c0_8, %c0_9] : memref<1x128xf32, #tpu.memory_space<vmem>>, vector<1x128xf32>
    %10 = vector.broadcast %9 : vector<1x128xf32> to vector<8x128xf32>
    %11 = arith.addf %8, %10 : vector<8x128xf32>
    %12 = tpu.iota {dimensions = array<i32: 1>} : vector<8x128xi32>
    %cst_10 = arith.constant dense<0xFF800000> : vector<8xf32>
    %13 = vector.multi_reduction <maximumf>, %11, %cst_10 [1] : vector<8x128xf32> to vector<8xf32>
    %14 = vector.shape_cast %13 : vector<8xf32> to vector<8x1xf32>
    %15 = vector.broadcast %14 : vector<8x1xf32> to vector<8x128xf32>
    %16 = arith.cmpf oeq, %11, %15 : vector<8x128xf32>
    %c128_i32 = arith.constant 128 : i32
    %17 = vector.broadcast %c128_i32 : i32 to vector<8x128xi32>
    %18 = arith.select %16, %12, %17 : vector<8x128xi1>, vector<8x128xi32>
    %cst_11 = arith.constant dense<2147483647> : vector<8xi32>
    %19 = vector.multi_reduction <minsi>, %18, %cst_11 [1] : vector<8x128xi32> to vector<8xi32>
    %20 = vector.shape_cast %19 : vector<8xi32> to vector<8x1xi32>
    %c0_12 = arith.constant 0 : index
    %c0_13 = arith.constant 0 : index
    %21 = vector.load %arg7[%c0_12, %c0_13] : memref<8x1xi32, #tpu.memory_space<vmem>>, vector<8x1xi32>
    tpu.vector_store %arg7[%c0_12, %c0_13], %20 {strides = array<i32>} : memref<8x1xi32, #tpu.memory_space<vmem>>, vector<8x1xi32>,
    %22 = vector.broadcast %14 : vector<8x1xf32> to vector<8x128xf32>
    %23 = arith.subf %11, %22 : vector<8x128xf32>
    %24 = math.exp %23 : vector<8x128xf32>
    %cst_14 = arith.constant dense<0.000000e+00> : vector<8xf32>
    %25 = vector.multi_reduction <add>, %24, %cst_14 [1] : vector<8x128xf32> to vector<8xf32>
    %26 = vector.shape_cast %25 : vector<8xf32> to vector<8x1xf32>
    %27 = tpu.reciprocal %26 {approx = true} : vector<8x1xf32> -> vector<8x1xf32>
    %28 = vector.broadcast %27 : vector<8x1xf32> to vector<8x128xf32>
    %29 = arith.mulf %24, %28 : vector<8x128xf32>
    %c0_15 = arith.constant 0 : index
    %c0_16 = arith.constant 0 : index
    %30 = vector.load %arg6[%c0_15, %c0_16] : memref<8x128xf32, #tpu.memory_space<vmem>>, vector<8x128xf32>
    tpu.vector_store %arg6[%c0_15, %c0_16], %29 {strides = array<i32>} : memref<8x128xf32, #tpu.memory_space<vmem>>, vector<8x128xf32>,
    return
  }
  func.func @transform_0(%arg0: i32) -> (i32, i32) {
    %c0_i32 = arith.constant 0 : i32
    %c0_i32_0 = arith.constant 0 : i32
    return %arg0, %c0_i32 : i32, i32
  }
  func.func @transform_1(%arg0: i32) -> (i32, i32) {
    %c0_i32 = arith.constant 0 : i32
    %c0_i32_0 = arith.constant 0 : i32
    %c0_i32_1 = arith.constant 0 : i32
    return %c0_i32, %c0_i32_0 : i32, i32
  }
  func.func @transform_2(%arg0: i32) -> (i32, i32) {
    %c0_i32 = arith.constant 0 : i32
    %c0_i32_0 = arith.constant 0 : i32
    %c0_i32_1 = arith.constant 0 : i32
    return %c0_i32, %c0_i32_0 : i32, i32
  }
  func.func @transform_3(%arg0: i32) -> (i32, i32) {
    %c0_i32 = arith.constant 0 : i32
    %c0_i32_0 = arith.constant 0 : i32
    %c0_i32_1 = arith.constant 0 : i32
    return %c0_i32, %c0_i32_0 : i32, i32
  }
  func.func @transform_4(%arg0: i32) -> (i32, i32) {
    %c0_i32 = arith.constant 0 : i32
    %c0_i32_0 = arith.constant 0 : i32
    %c0_i32_1 = arith.constant 0 : i32
    return %c0_i32, %c0_i32_0 : i32, i32
  }
  func.func @transform_5(%arg0: i32) -> (i32, i32) {
    %c0_i32 = arith.constant 0 : i32
    %c0_i32_0 = arith.constant 0 : i32
    return %arg0, %c0_i32 : i32, i32
  }
  func.func @transform_6(%arg0: i32) -> (i32, i32) {
    %c0_i32 = arith.constant 0 : i32
    %c0_i32_0 = arith.constant 0 : i32
    return %arg0, %c0_i32 : i32, i32
  }
}

</mosaic_0001>

<llo_original>
// kernel: tc_forward.1
$region0: #{tc_forward.1}
  #allocation0 [shape = 'u32[]', space=smem, size = 0x4, offset = 0x4, fixed_abs, tag = 'smem constant byte address 0x4 - core index']
  #allocation1 [shape = 'u32[144,128]{1,0:T(1,128)}', space=vmem, size = 0x12000, scoped, tag = 'internal scratch']
  %s0 = inlined_call_operand.vmem [shape: f32[8,32], index: 0, kind: input, shape index: {}]
  %s1 = inlined_call_operand.vmem [shape: f32[32,32], index: 1, kind: input, shape index: {}]
  %s2 = inlined_call_operand.vmem [shape: f32[1,32], index: 2, kind: input, shape index: {}]
  %s3 = inlined_call_operand.vmem [shape: f32[32,128], index: 3, kind: input, shape index: {}]
  %s4 = inlined_call_operand.vmem [shape: f32[1,128], index: 4, kind: input, shape index: {}]
  %s5 = inlined_call_operand.vmem [shape: f32[8,128], index: 5, kind: output, shape index: {0}]
  %s6 = inlined_call_operand.vmem [shape: s32[8,1], index: 6, kind: output, shape index: {1}]
  %7 = xla_tuple %s5, %s6
  %s8 = sld [smem:[#allocation0]]
  $region38: #{tc_forward.1} parent=0
    _
  %s10 = ssub.s32 1, %s8
  %s11 = scalar_select 0, %s10, %s8
  // Predicated region
  $region2: #{tc_forward.1} parent=0 // pred_check
    _
  $region3: #{tc_forward.1} parent=0 // pred_check_branch
    %13 = sbr.rel (0) target = $region5
  $region4: #{tc_forward.1} parent=0 // pred_region
    _
  $region5: #{tc_forward.1} parent=0 // pred_fallthru
    _
  // Predicated region
  $region6: #{tc_forward.1} parent=0 // pred_check
    _
  $region7: #{tc_forward.1} parent=0 // pred_check_branch
    %15 = sbr.rel (0) target = $region9
  $region8: #{tc_forward.1} parent=0 // pred_region
    _
  $region9: #{tc_forward.1} parent=0 // pred_fallthru
    _
  // Predicated region
  $region10: #{tc_forward.1} parent=0 // pred_check
    _
  $region11: #{tc_forward.1} parent=0 // pred_check_branch
    %17 = sbr.rel (0) target = $region13
  $region12: #{tc_forward.1} parent=0 // pred_region
    _
  $region13: #{tc_forward.1} parent=0 // pred_fallthru
    _
  // Predicated region
  $region14: #{tc_forward.1} parent=0 // pred_check
    _
  $region15: #{tc_forward.1} parent=0 // pred_check_branch
    %19 = sbr.rel (0) target = $region17
  $region16: #{tc_forward.1} parent=0 // pred_region
    _
  $region17: #{tc_forward.1} parent=0 // pred_fallthru
    _
  // Predicated region
  $region18: #{tc_forward.1} parent=0 // pred_check
    _
  $region19: #{tc_forward.1} parent=0 // pred_check_branch
    %21 = sbr.rel (0) target = $region21
  $region20: #{tc_forward.1} parent=0 // pred_region
    _
  $region21: #{tc_forward.1} parent=0 // pred_fallthru
    _
  %v22 = vld [vmem:[%s0] sm:$0xff]
  %v23 = vld [vmem:[%s1] sm:$0xff]
  %v24 = vld [vmem:[%s1 + $0x8] sm:$0xff]
  %v25 = vld [vmem:[%s1 + $0x10] sm:$0xff]
  %v26 = vld [vmem:[%s1 + $0x18] sm:$0xff]
  %v27 = vld [vmem:[%s2] sm:$0x1]
  %v29 = vlaneseq
  %v30 = vshrl.u32 %v29, 7
  %v31 = vsub.s32 0, %v30
  %v32 = vrot.slane %v27, %v31
  %vm34 = vcmask 261120
  %v36 = vsel %vm34, %v22, 0
  %38 = vmatprep.subr.mxu0 0.0
  %39 = vmatpush1.msra.mxu0 0.0
  %40 = vmatprep.subr.mxu0 0.0
  %41 = vmatpush1.msra.mxu0 0.0
  %42 = vmatprep.subr.mxu0 0.0
  %43 = vmatpush1.msra.mxu0 0.0
  %44 = vmatprep.subr.mxu0 0.0
  %45 = vmatpush1.msra.mxu0 0.0
  %46 = vmatprep.subr.mxu0 0.0
  %47 = vmatpush1.msra.mxu0 0.0
  %48 = vmatprep.subr.mxu0 0.0
  %49 = vmatpush1.msra.mxu0 0.0
  %50 = vmatprep.subr.mxu0 0.0
  %51 = vmatpush1.msra.mxu0 0.0
  %52 = vmatprep.subr.mxu0 0.0
  %53 = vmatpush1.msra.mxu0 0.0
  %54 = vmatprep.subr.mxu0 0.0
  %55 = vmatpush1.msra.mxu0 0.0
  %56 = vmatprep.subr.mxu0 0.0
  %57 = vmatpush1.msra.mxu0 0.0
  %58 = vmatprep.subr.mxu0 0.0
  %59 = vmatpush1.msra.mxu0 0.0
  %60 = vmatprep.subr.mxu0 0.0
  %61 = vmatpush1.msra.mxu0 0.0
  %62 = vmatprep.subr.mxu0 0.0
  %63 = vmatpush1.msra.mxu0 %v26
  %64 = vmatprep.subr.mxu0 0.0
  %65 = vmatpush1.msra.mxu0 %v25
  %66 = vmatprep.subr.mxu0 0.0
  %67 = vmatpush1.msra.mxu0 %v24
  %68 = vmatprep.subr.mxu0 0.0
  %69 = vmatpush1.msra.mxu0 %v23
  %70 = vmatprep.subr.mxu0 0.0
  %71 = vmatpush2.msra.mxu0 0.0
  %72 = vmatprep.subr.mxu0 0.0
  %73 = vmatpush2.msra.mxu0 0.0
  %74 = vmatprep.subr.mxu0 0.0
  %75 = vmatpush2.msra.mxu0 0.0
  %76 = vmatprep.subr.mxu0 0.0
  %77 = vmatpush2.msra.mxu0 0.0
  %78 = vmatprep.subr.mxu0 0.0
  %79 = vmatpush2.msra.mxu0 0.0
  %80 = vmatprep.subr.mxu0 0.0
  %81 = vmatpush2.msra.mxu0 0.0
  %82 = vmatprep.subr.mxu0 0.0
  %83 = vmatpush2.msra.mxu0 0.0
  %84 = vmatprep.subr.mxu0 0.0
  %85 = vmatpush2.msra.mxu0 0.0
  %86 = vmatprep.subr.mxu0 0.0
  %87 = vmatpush2.msra.mxu0 0.0
  %88 = vmatprep.subr.mxu0 0.0
  %89 = vmatpush2.msra.mxu0 0.0
  %90 = vmatprep.subr.mxu0 0.0
  %91 = vmatpush2.msra.mxu0 0.0
  %92 = vmatprep.subr.mxu0 0.0
  %93 = vmatpush2.msra.mxu0 0.0
  %94 = vmatprep.subr.mxu0 0.0
  %95 = vmatpush2.msra.mxu0 0.0
  %96 = vmatprep.subr.mxu0 0.0
  %97 = vmatpush2.msra.mxu0 0.0
  %98 = vmatprep.subr.mxu0 0.0
  %99 = vmatpush2.msra.mxu0 0.0
  %100 = vmatprep.subr.mxu0 0.0
  %101 = vmatpush2.msra.mxu0 0.0
  %102 = vmatprep.mubr.f32.mxu0 0.0
  %103 = vmatmul.mubr.f32.gmra.mxu0 %v36
  %v104 = vpop.f32.mrf.mxu0
  %v105 = vadd.f32 %v32, %v104
  %v106 = vpop.f32.mrf.mxu0
  %107 = vdwg.mxu0
  %v108 = vtanh.pop %v105
  %v109 = vld [vmem:[%s3] sm:$0xff]
  %v110 = vld [vmem:[%s3 + $0x8] sm:$0xff]
  %v111 = vld [vmem:[%s3 + $0x10] sm:$0xff]
  %v112 = vld [vmem:[%s3 + $0x18] sm:$0xff]
  %v113 = vld [vmem:[%s4] sm:$0x1]
  %v115 = vlaneseq
  %v116 = vshrl.u32 %v115, 7
  %v117 = vsub.s32 0, %v116
  %v118 = vrot.slane %v113, %v117
  %v121 = vsel %vm34, %v108, 0
  %123 = vmatprep.subr.mxu0 0.0
  %124 = vmatpush1.msra.mxu0 0.0
  %125 = vmatprep.subr.mxu0 0.0
  %126 = vmatpush1.msra.mxu0 0.0
  %127 = vmatprep.subr.mxu0 0.0
  %128 = vmatpush1.msra.mxu0 0.0
  %129 = vmatprep.subr.mxu0 0.0
  %130 = vmatpush1.msra.mxu0 0.0
  %131 = vmatprep.subr.mxu0 0.0
  %132 = vmatpush1.msra.mxu0 0.0
  %133 = vmatprep.subr.mxu0 0.0
  %134 = vmatpush1.msra.mxu0 0.0
  %135 = vmatprep.subr.mxu0 0.0
  %136 = vmatpush1.msra.mxu0 0.0
  %137 = vmatprep.subr.mxu0 0.0
  %138 = vmatpush1.msra.mxu0 0.0
  %139 = vmatprep.subr.mxu0 0.0
  %140 = vmatpush1.msra.mxu0 0.0
  %141 = vmatprep.subr.mxu0 0.0
  %142 = vmatpush1.msra.mxu0 0.0
  %143 = vmatprep.subr.mxu0 0.0
  %144 = vmatpush1.msra.mxu0 0.0
  %145 = vmatprep.subr.mxu0 0.0
  %146 = vmatpush1.msra.mxu0 0.0
  %147 = vmatprep.subr.mxu0 0.0
  %148 = vmatpush1.msra.mxu0 %v112
  %149 = vmatprep.subr.mxu0 0.0
  %150 = vmatpush1.msra.mxu0 %v111
  %151 = vmatprep.subr.mxu0 0.0
  %152 = vmatpush1.msra.mxu0 %v110
  %153 = vmatprep.subr.mxu0 0.0
  %154 = vmatpush1.msra.mxu0 %v109
  %155 = vmatprep.subr.mxu0 0.0
  %156 = vmatpush2.msra.mxu0 0.0
  %157 = vmatprep.subr.mxu0 0.0
  %158 = vmatpush2.msra.mxu0 0.0
  %159 = vmatprep.subr.mxu0 0.0
  %160 = vmatpush2.msra.mxu0 0.0
  %161 = vmatprep.subr.mxu0 0.0
  %162 = vmatpush2.msra.mxu0 0.0
  %163 = vmatprep.subr.mxu0 0.0
  %164 = vmatpush2.msra.mxu0 0.0
  %165 = vmatprep.subr.mxu0 0.0
  %166 = vmatpush2.msra.mxu0 0.0
  %167 = vmatprep.subr.mxu0 0.0
  %168 = vmatpush2.msra.mxu0 0.0
  %169 = vmatprep.subr.mxu0 0.0
  %170 = vmatpush2.msra.mxu0 0.0
  %171 = vmatprep.subr.mxu0 0.0
  %172 = vmatpush2.msra.mxu0 0.0
  %173 = vmatprep.subr.mxu0 0.0
  %174 = vmatpush2.msra.mxu0 0.0
  %175 = vmatprep.subr.mxu0 0.0
  %176 = vmatpush2.msra.mxu0 0.0
  %177 = vmatprep.subr.mxu0 0.0
  %178 = vmatpush2.msra.mxu0 0.0
  %179 = vmatprep.subr.mxu0 0.0
  %180 = vmatpush2.msra.mxu0 0.0
  %181 = vmatprep.subr.mxu0 0.0
  %182 = vmatpush2.msra.mxu0 0.0
  %183 = vmatprep.subr.mxu0 0.0
  %184 = vmatpush2.msra.mxu0 0.0
  %185 = vmatprep.subr.mxu0 0.0
  %186 = vmatpush2.msra.mxu0 0.0
  %187 = vmatprep.mubr.f32.mxu0 0.0
  %188 = vmatmul.mubr.f32.gmra.mxu0 %v121
  %v189 = vpop.f32.mrf.mxu0
  %v190 = vadd.f32 %v118, %v189
  %v191 = vpop.f32.mrf.mxu0
  %192 = vdwg.mxu0
  %v193 = vlaneseq
  %v194 = vand.u32 %v193, 127
  %195 = vmax.xlane.f32.xlu0 %v190
  %v196 = vpop.xlane.xlu0 %195
  %vm197 = vcmp.eq.f32.partialorder %v190, %v196
  %v198 = vsel %vm197, %v194, 128
  %v199 = vand.u32 %v198, 65535
  %v200 = vshra.s32 %v198, 16
  %v201 = vcvt.s32.f32 %v199
  %v202 = vcvt.s32.f32 %v200
  %203 = vmin.xlane.f32.xlu0 %v202
  %v204 = vpop.xlane.xlu0 %203
  %vm205 = vcmp.eq.f32.partialorder %v202, %v204
  %v206 = vsel %vm205, %v201, inf
  %207 = vmin.xlane.f32.xlu0 %v206
  %v208 = vpop.xlane.xlu0 %207
  %v209 = vcvt.f32.s32 %v208
  %v210 = vcvt.f32.s32 %v204
  %v211 = vshll.u32 %v210, 16
  %v212 = vadd.s32 %v211, %v209
  %vm213 = vcmask 7168
  %214 = vst.msk [vmem:[%s6] sm:$0xff] %vm213, %v212
  %v215 = vsub.f32 %v190, %v196
  %v216 = vmul.f32 %v215, 1.442695
  %v217 = vpow.pop %v216
  %218 = vadd.xlane.f32.xlu0 %v217
  %v219 = vpop.xlane.xlu0 %218
  %v220 = vrcp.pop %v219
  %v221 = vmul.f32 %v217, %v220
  %222 = vst [vmem:[%s5] sm:$0xff] %v221
  // Predicated region
  $region22: #{tc_forward.1} parent=0 // pred_check
    _
  $region23: #{tc_forward.1} parent=0 // pred_check_branch
    %224 = sbr.rel (0) target = $region25
  $region24: #{tc_forward.1} parent=0 // pred_region
    _
  $region25: #{tc_forward.1} parent=0 // pred_fallthru
    _
  // Predicated region
  $region26: #{tc_forward.1} parent=0 // pred_check
    _
  $region27: #{tc_forward.1} parent=0 // pred_check_branch
    %226 = sbr.rel (0) target = $region29
  $region28: #{tc_forward.1} parent=0 // pred_region
    _
  $region29: #{tc_forward.1} parent=0 // pred_fallthru
    _
  // Predicated region
  $region30: #{tc_forward.1} parent=0 // pred_check
    _
  $region31: #{tc_forward.1} parent=0 // pred_check_branch
    %228 = sbr.rel (0) target = $region33
  $region32: #{tc_forward.1} parent=0 // pred_region
    _
  $region33: #{tc_forward.1} parent=0 // pred_fallthru
    _
  // Predicated region
  $region34: #{tc_forward.1} parent=0 // pred_check
    _
  $region35: #{tc_forward.1} parent=0 // pred_check_branch
    %230 = sbr.rel (0) target = $region37
  $region36: #{tc_forward.1} parent=0 // pred_region
    _
  $region37: #{tc_forward.1} parent=0 // pred_fallthru
    _

</llo_original>
